<compile_context>
chip_gen: v6e
topology: v6e:2x2x1
jax: 0.10.0
libtpu: 0.0.40
codegen_flags: <defaults>
</compile_context>

<pallas_src>
import functools
import numpy as np

import jax
import jax.numpy as jnp
from jax import lax
from jax.experimental import pallas as pl
from jax.experimental.pallas import tpu as pltpu


def _highpass_kernel(x_ref, o_ref, *, H, W, S, S_pad, inv_w_hpf):
    x = x_ref[...].astype(jnp.float32)                    # (TR, S_pad)

    # Boundary masks at (1, S_pad); broadcast over rows.  No integer divide:
    #   h >= 1     <=>  lane >= W
    #   h <= H-2   <=>  lane <  S - W
    lane = lax.broadcasted_iota(jnp.int32, (1, S_pad), 1)
    m_up = lane >= W
    m_down = lane < (S - W)
    if (W & (W - 1)) == 0:                                # power-of-two width
        w_idx = lane & (W - 1)
    else:
        w_idx = lane % W                                   # only on (1, S_pad)
    m_left = w_idx >= 1
    m_right = w_idx <= (W - 2)

    # Vertical 3-tap sum with zero padding at top/bottom rows.
    # roll(x, k)[s] = x[(s - k) mod S_pad]
    up = jnp.where(m_up, pltpu.roll(x, W, axis=1), 0.0)            # x[h-1, w]
    down = jnp.where(m_down, pltpu.roll(x, S_pad - W, axis=1), 0.0)  # x[h+1, w]
    col = up + x + down

    # Horizontal 3-tap sum of the column sums, zero padding at left/right.
    left = jnp.where(m_left, pltpu.roll(col, 1, axis=1), 0.0)      # col[h, w-1]
    right = jnp.where(m_right, pltpu.roll(col, S_pad - 1, axis=1), 0.0)
    box = left + col + right                              # zero-padded 3x3 box

    # high-pass: 8*x - (8-neighbor sum) = 9*x - box, scaled by 1/w_hpf
    o_ref[...] = ((9.0 * x - box) * inv_w_hpf).astype(o_ref.dtype)


def highpass(x_nchw, w_hpf):
    N, C, H, W = x_nchw.shape
    S = H * W
    S_pad = ((S + 127) // 128) * 128                      # lane-dense last dim
    R = N * C                                             # fold batch*channels

    x = x_nchw.reshape(R, S)
    if S_pad != S:
        x = jnp.pad(x, ((0, 0), (0, S_pad - S)))

    # Row tile: sublane aligned (16 covers bf16 packing, also a multiple of 8),
    # sized so 2(in/out) x 2(double-buffer) blocks stay well inside the scoped
    # VMEM default on every TPU generation (v5e 16 MiB, v7x 32 MiB).
    itemsize = jnp.dtype(x.dtype).itemsize
    budget_per_block = 2 * 1024 * 1024                    # bytes per array/block
    align = 16
    tr = budget_per_block // (S_pad * itemsize)
    tr = max(align, min(1024, (tr // align) * align))
    if R <= tr:
        tr = R                                            # full-extent block OK
    grid = (pl.cdiv(R, tr),)

    kernel = functools.partial(
        _highpass_kernel, H=H, W=W, S=S, S_pad=S_pad,
        inv_w_hpf=1.0 / float(w_hpf))

    out = pl.pallas_call(
        kernel,
        out_shape=jax.ShapeDtypeStruct((R, S_pad), x.dtype),
        grid=grid,
        in_specs=[pl.BlockSpec((tr, S_pad), lambda r: (r, 0))],
        out_specs=pl.BlockSpec((tr, S_pad), lambda r: (r, 0)),
        compiler_params=pltpu.CompilerParams(
            dimension_semantics=("parallel",)),
    )(x)

    if S_pad != S:
        out = out[:, :S]
    return out.reshape(N, C, H, W)


highpass_jit = jax.jit(highpass, static_argnums=(1,))


# ---------------- pure-JAX reference (for correctness check) ----------------
def ref_forward(x, w_hpf):
    C = x.shape[1]
    filt = jnp.array([[-1.0, -1.0, -1.0],
                      [-1.0,  8.0, -1.0],
                      [-1.0, -1.0, -1.0]], jnp.float32) / w_hpf
    w = jnp.tile(filt[None, None], (C, 1, 1, 1))          # (C, 1, 3, 3) depthwise
    return lax.conv_general_dilated(
        x, w, (1, 1), [(1, 1), (1, 1)],
        dimension_numbers=("NCHW", "OIHW", "NCHW"),
        feature_group_count=C, precision=lax.Precision.HIGHEST)


if __name__ == "__main__":
    key = jax.random.PRNGKey(0)
    w_hpf = 1.0

    # Main check: lane-aligned spatial size (S = 256).
    x = jax.random.normal(key, (2, 4, 16, 16), jnp.float32)
    out = jax.block_until_ready(highpass_jit(x, w_hpf))
    ref = jax.block_until_ready(ref_forward(x, w_hpf))
    np.testing.assert_allclose(np.asarray(out), np.asarray(ref),
                               atol=1e-4, rtol=1e-4)

    # Padding path: S = 5*7 = 35 (not a multiple of 128), non-power-of-two W.
    x2 = jax.random.normal(jax.random.PRNGKey(1), (2, 4, 5, 7), jnp.float32)
    out2 = jax.block_until_ready(highpass_jit(x2, w_hpf))
    ref2 = jax.block_until_ready(ref_forward(x2, w_hpf))
    np.testing.assert_allclose(np.asarray(out2), np.asarray(ref2),
                               atol=1e-4, rtol=1e-4)

    print("KERNEL_OK")
</pallas_src>

<mosaic_0001>
module attributes {stable_mosaic.version = 11 : i64} {
  func.func @_highpass_kernel(%arg0: i32, %arg1: memref<8x256xf32, #tpu.memory_space<vmem>>, %arg2: memref<8x256xf32, #tpu.memory_space<vmem>>) attributes {dimension_semantics = [#tpu.dimension_semantics<parallel>], iteration_bounds = array<i64: 1>, scalar_prefetch = 0 : i64, scratch_operands = 0 : i64, tpu.core_type = #tpu.core_type<tc>, window_params = [{transform_indices = @transform_0, window_bounds = array<i64: 8, 256>}, {transform_indices = @transform_1, window_bounds = array<i64: 8, 256>}]} {
    %c0 = arith.constant 0 : index
    %c0_0 = arith.constant 0 : index
    %0 = vector.load %arg1[%c0, %c0_0] : memref<8x256xf32, #tpu.memory_space<vmem>>, vector<8x256xf32>
    %1 = tpu.iota {dimensions = array<i32: 1>} : vector<1x256xi32>
    %c16_i32 = arith.constant 16 : i32
    %2 = vector.broadcast %c16_i32 : i32 to vector<1x256xi32>
    %3 = arith.cmpi sge, %1, %2 : vector<1x256xi32>
    %c240_i32 = arith.constant 240 : i32
    %4 = vector.broadcast %c240_i32 : i32 to vector<1x256xi32>
    %5 = arith.cmpi slt, %1, %4 : vector<1x256xi32>
    %c15_i32 = arith.constant 15 : i32
    %6 = vector.broadcast %c15_i32 : i32 to vector<1x256xi32>
    %7 = arith.andi %1, %6 : vector<1x256xi32>
    %c1_i32 = arith.constant 1 : i32
    %8 = vector.broadcast %c1_i32 : i32 to vector<1x256xi32>
    %9 = arith.cmpi sge, %7, %8 : vector<1x256xi32>
    %c14_i32 = arith.constant 14 : i32
    %10 = vector.broadcast %c14_i32 : i32 to vector<1x256xi32>
    %11 = arith.cmpi sle, %7, %10 : vector<1x256xi32>
    %c16_i32_1 = arith.constant 16 : i32
    %12 = tpu.dynamic_rotate %0 by %c16_i32_1 dim 1 : vector<8x256xf32>, i32 -> vector<8x256xf32>
    %cst = arith.constant 0.000000e+00 : f32
    %13 = vector.shape_cast %3 : vector<1x256xi1> to vector<1x256xi1>
    %14 = vector.broadcast %13 : vector<1x256xi1> to vector<8x256xi1>
    %15 = vector.broadcast %cst : f32 to vector<8x256xf32>
    %16 = arith.select %14, %12, %15 : vector<8x256xi1>, vector<8x256xf32>
    %c240_i32_2 = arith.constant 240 : i32
    %17 = tpu.dynamic_rotate %0 by %c240_i32_2 dim 1 : vector<8x256xf32>, i32 -> vector<8x256xf32>
    %cst_3 = arith.constant 0.000000e+00 : f32
    %18 = vector.shape_cast %5 : vector<1x256xi1> to vector<1x256xi1>
    %19 = vector.broadcast %18 : vector<1x256xi1> to vector<8x256xi1>
    %20 = vector.broadcast %cst_3 : f32 to vector<8x256xf32>
    %21 = arith.select %19, %17, %20 : vector<8x256xi1>, vector<8x256xf32>
    %22 = arith.addf %16, %0 : vector<8x256xf32>
    %23 = arith.addf %22, %21 : vector<8x256xf32>
    %c1_i32_4 = arith.constant 1 : i32
    %24 = tpu.dynamic_rotate %23 by %c1_i32_4 dim 1 : vector<8x256xf32>, i32 -> vector<8x256xf32>
    %cst_5 = arith.constant 0.000000e+00 : f32
    %25 = vector.shape_cast %9 : vector<1x256xi1> to vector<1x256xi1>
    %26 = vector.broadcast %25 : vector<1x256xi1> to vector<8x256xi1>
    %27 = vector.broadcast %cst_5 : f32 to vector<8x256xf32>
    %28 = arith.select %26, %24, %27 : vector<8x256xi1>, vector<8x256xf32>
    %c255_i32 = arith.constant 255 : i32
    %29 = tpu.dynamic_rotate %23 by %c255_i32 dim 1 : vector<8x256xf32>, i32 -> vector<8x256xf32>
    %cst_6 = arith.constant 0.000000e+00 : f32
    %30 = vector.shape_cast %11 : vector<1x256xi1> to vector<1x256xi1>
    %31 = vector.broadcast %30 : vector<1x256xi1> to vector<8x256xi1>
    %32 = vector.broadcast %cst_6 : f32 to vector<8x256xf32>
    %33 = arith.select %31, %29, %32 : vector<8x256xi1>, vector<8x256xf32>
    %34 = arith.addf %28, %23 : vector<8x256xf32>
    %35 = arith.addf %34, %33 : vector<8x256xf32>
    %cst_7 = arith.constant 9.000000e+00 : f32
    %36 = vector.broadcast %cst_7 : f32 to vector<8x256xf32>
    %37 = arith.mulf %36, %0 : vector<8x256xf32>
    %38 = arith.subf %37, %35 : vector<8x256xf32>
    %cst_8 = arith.constant 1.000000e+00 : f32
    %39 = vector.broadcast %cst_8 : f32 to vector<8x256xf32>
    %40 = arith.mulf %38, %39 : vector<8x256xf32>
    %c0_9 = arith.constant 0 : index
    %c0_10 = arith.constant 0 : index
    %41 = vector.load %arg2[%c0_9, %c0_10] : memref<8x256xf32, #tpu.memory_space<vmem>>, vector<8x256xf32>
    tpu.vector_store %arg2[%c0_9, %c0_10], %40 {strides = array<i32>} : memref<8x256xf32, #tpu.memory_space<vmem>>, vector<8x256xf32>,
    return
  }
  func.func @transform_0(%arg0: i32) -> (i32, i32) {
    %c0_i32 = arith.constant 0 : i32
    %c0_i32_0 = arith.constant 0 : i32
    return %arg0, %c0_i32 : i32, i32
  }
  func.func @transform_1(%arg0: i32) -> (i32, i32) {
    %c0_i32 = arith.constant 0 : i32
    %c0_i32_0 = arith.constant 0 : i32
    return %arg0, %c0_i32 : i32, i32
  }
}

</mosaic_0001>

<llo_original>
// kernel: highpass.1
$region0: #{highpass.1}
  #allocation0 [shape = 'u32[]', space=smem, size = 0x4, offset = 0x4, fixed_abs, tag = 'smem constant byte address 0x4 - core index']
  #allocation1 [shape = 'u32[144,128]{1,0:T(1,128)}', space=vmem, size = 0x12000, scoped, tag = 'internal scratch']
  %s0 = inlined_call_operand.vmem [shape: f32[8,256], index: 0, kind: input, shape index: {}]
  %s1 = inlined_call_operand.vmem [shape: f32[8,256], index: 1, kind: output, shape index: {}]
  %s2 = sld [smem:[#allocation0]]
  $region14: #{highpass.1} parent=0
    _
  %s4 = ssub.s32 1, %s2
  %s5 = scalar_select 0, %s4, %s2
  // Predicated region
  $region2: #{highpass.1} parent=0 // pred_check
    _
  $region3: #{highpass.1} parent=0 // pred_check_branch
    %7 = sbr.rel (0) target = $region5
  $region4: #{highpass.1} parent=0 // pred_region
    _
  $region5: #{highpass.1} parent=0 // pred_fallthru
    _
  %v8 = vld [vmem:[%s0] sm:$0xff]
  %v9 = vld [vmem:[%s0 + $0x8] sm:$0xff]
  %v10 = vlaneseq
  %v11 = vand.u32 %v10, 127
  %v12 = vadd.s32 %v11, 128
  %vm13 = vcmp.ge.s32.totalorder %v11, 16
  %vm14 = vcmp.ge.s32.totalorder %v12, 16
  %vm15 = vcmp.lt.s32.totalorder %v11, 240
  %vm16 = vcmp.lt.s32.totalorder %v12, 240
  %v17 = vand.u32 %v11, 15
  %v18 = vand.u32 %v12, 15
  %vm19 = vcmp.ge.s32.totalorder %v17, 1
  %vm20 = vcmp.ge.s32.totalorder %v18, 1
  %vm21 = vcmp.le.s32.totalorder %v17, 14
  %vm22 = vcmp.le.s32.totalorder %v18, 14
  %23 = vrot.lane.b32.xlu0 %v8, 16
  %v24 = vpop.permute.xlu0 %23
  %25 = vrot.lane.b32.xlu0 %v9, 16
  %v26 = vpop.permute.xlu0 %25
  %vm27 = vcmp.lt.s32.totalorder %v11, 16
  %v28 = vsel %vm27, %v24, %v26
  %v29 = vsel %vm27, %v26, %v24
  %v30 = vsel %vm13, 1, 0
  %v31 = vsel %vm14, 1, 0
  %vm32 = vcmp.eq.s32.totalorder %v30, 1
  %vm33 = vcmp.eq.s32.totalorder %v31, 1
  %v34 = vsel %vm32, %v29, 0.0
  %v35 = vsel %vm33, %v28, 0.0
  %36 = vrot.lane.b32.xlu0 %v8, 112
  %v37 = vpop.permute.xlu0 %36
  %38 = vrot.lane.b32.xlu0 %v9, 112
  %v39 = vpop.permute.xlu0 %38
  %vm40 = vcmp.lt.s32.totalorder %v11, 112
  %v41 = vsel %vm40, %v37, %v39
  %v42 = vsel %vm40, %v39, %v37
  %v43 = vsel %vm15, 1, 0
  %v44 = vsel %vm16, 1, 0
  %vm45 = vcmp.eq.s32.totalorder %v43, 1
  %vm46 = vcmp.eq.s32.totalorder %v44, 1
  %v47 = vsel %vm45, %v41, 0.0
  %v48 = vsel %vm46, %v42, 0.0
  %v49 = vadd.f32 %v34, %v8
  %v50 = vadd.f32 %v35, %v9
  %v51 = vadd.f32 %v49, %v47
  %v52 = vadd.f32 %v50, %v48
  %53 = vrot.lane.b32.xlu0 %v51, 1
  %v54 = vpop.permute.xlu0 %53
  %55 = vrot.lane.b32.xlu0 %v52, 1
  %v56 = vpop.permute.xlu0 %55
  %vm57 = vcmp.lt.s32.totalorder %v11, 1
  %v58 = vsel %vm57, %v54, %v56
  %v59 = vsel %vm57, %v56, %v54
  %v60 = vsel %vm19, 1, 0
  %v61 = vsel %vm20, 1, 0
  %vm62 = vcmp.eq.s32.totalorder %v60, 1
  %vm63 = vcmp.eq.s32.totalorder %v61, 1
  %v64 = vsel %vm62, %v59, 0.0
  %v65 = vsel %vm63, %v58, 0.0
  %66 = vrot.lane.b32.xlu0 %v51, 127
  %v67 = vpop.permute.xlu0 %66
  %68 = vrot.lane.b32.xlu0 %v52, 127
  %v69 = vpop.permute.xlu0 %68
  %vm70 = vcmp.lt.s32.totalorder %v11, 127
  %v71 = vsel %vm70, %v67, %v69
  %v72 = vsel %vm70, %v69, %v67
  %v73 = vsel %vm21, 1, 0
  %v74 = vsel %vm22, 1, 0
  %vm75 = vcmp.eq.s32.totalorder %v73, 1
  %vm76 = vcmp.eq.s32.totalorder %v74, 1
  %v77 = vsel %vm75, %v71, 0.0
  %v78 = vsel %vm76, %v72, 0.0
  %v79 = vadd.f32 %v64, %v51
  %v80 = vadd.f32 %v65, %v52
  %v81 = vadd.f32 %v79, %v77
  %v82 = vadd.f32 %v80, %v78
  %v83 = vmul.f32 %v8, 9.0
  %v84 = vmul.f32 %v9, 9.0
  %v85 = vsub.f32 %v83, %v81
  %v86 = vsub.f32 %v84, %v82
  %87 = vst [vmem:[%s1] sm:$0xff] %v85
  %88 = vst [vmem:[%s1 + $0x8] sm:$0xff] %v86
  // Predicated region
  $region6: #{highpass.1} parent=0 // pred_check
    _
  $region7: #{highpass.1} parent=0 // pred_check_branch
    %90 = sbr.rel (0) target = $region9
  $region8: #{highpass.1} parent=0 // pred_region
    _
  $region9: #{highpass.1} parent=0 // pred_fallthru
    _
  // Predicated region
  $region10: #{highpass.1} parent=0 // pred_check
    _
  $region11: #{highpass.1} parent=0 // pred_check_branch
    %92 = sbr.rel (0) target = $region13
  $region12: #{highpass.1} parent=0 // pred_region
    _
  $region13: #{highpass.1} parent=0 // pred_fallthru
    _

</llo_original>
